<compile_context>
chip_gen: v7x
topology: tpu7x:2x2x1
jax: 0.10.0
libtpu: 0.0.40
codegen_flags: <defaults>
</compile_context>

<pallas_src>
import functools

import jax
import jax.numpy as jnp
from jax.experimental import pallas as pl
from jax.experimental.pallas import tpu as pltpu


def _round_up(x, m):
    return (x + m - 1) // m * m


def dta_kernel(x_ref, w1_ref, b1_ref, g_ref, beta_ref,
               w2_ref, b2_ref, w3_ref, b3_ref, o_ref):
    # ---- linear1 (MXU, f32 accumulation) ----
    residual = jnp.dot(x_ref[...], w1_ref[...],
                       preferred_element_type=jnp.float32) + b1_ref[...]

    # ---- LayerNorm over the feature (lane) axis, eps = 1e-5 ----
    mean = jnp.mean(residual, axis=-1, keepdims=True)
    centered = residual - mean
    var = jnp.mean(centered * centered, axis=-1, keepdims=True)
    normed = centered * jax.lax.rsqrt(var + 1e-5) * g_ref[...] + beta_ref[...]

    # ---- ReLU + linear2 (MXU, f32 accumulation) ----
    h = jnp.maximum(normed, 0.0).astype(w2_ref.dtype)
    out = jnp.dot(h, w2_ref[...],
                  preferred_element_type=jnp.float32) + b2_ref[...]

    # ---- residual add ----
    z = residual + out

    # ---- final Linear(embed_dim, 1): VPU multiply + lane reduction ----
    # (avoids an N=1 MXU matmul; w3 arrives as a (1, D) row)
    y = jnp.sum(z * w3_ref[...], axis=-1, keepdims=True) + b3_ref[...]

    o_ref[...] = y.astype(o_ref.dtype)


@functools.partial(jax.jit, static_argnames=("batch_block", "compute_dtype"))
def dta_predictor(x, params, *, batch_block=256, compute_dtype=jnp.float32):
    """x: [B, D]. params: dict of weights. Returns [B, 1] float32.

    batch_block: rows per grid step (multiple of 8; 256+ recommended on
    v6e/v7x, 128-256 on v5e). compute_dtype: dtype of the two DxD matmul
    operands (jnp.bfloat16 unlocks the bf16 MXU rate; accumulation stays f32).
    """
    B, D = x.shape

    w1 = params["w1"].astype(compute_dtype)
    w2 = params["w2"].astype(compute_dtype)
    b1 = params["b1"].astype(jnp.float32).reshape(1, D)
    gamma = params["gamma"].astype(jnp.float32).reshape(1, D)
    beta = params["beta"].astype(jnp.float32).reshape(1, D)
    b2 = params["b2"].astype(jnp.float32).reshape(1, D)
    w3 = params["w3"].astype(jnp.float32).reshape(1, D)   # row vector for mul+reduce
    b3 = params["b3"].astype(jnp.float32).reshape(1, 1)

    # Batch tile: multiple of 8 sublanes, clamped to the (padded) batch.
    tb = min(batch_block, _round_up(B, 8))
    b_pad = _round_up(B, tb)
    if b_pad != B:
        x = jnp.pad(x, ((0, b_pad - B), (0, 0)))
    x = x.astype(compute_dtype)

    grid = (b_pad // tb,)
    item = jnp.dtype(compute_dtype).itemsize

    # VMEM budget: resident weights + double-buffered x/out tiles + f32
    # intermediates, plus headroom.
    # TODO(synk): for very large embed_dim on v7x (64 MiB VMEM), tile the
    # contraction (K) axis with an accumulator instead of keeping both DxD
    # weights fully resident.
    need = (2 * D * D * item          # W1 + W2 resident
            + 2 * tb * D * item       # double-buffered x tiles
            + 2 * tb * 4              # double-buffered output tiles
            + 10 * tb * D * 4         # f32 intermediates headroom
            + 6 * D * 4 + 1024)       # biases / gamma / beta / w3 / b3
    vmem_limit = int(min(max(need, 32 * 2**20), 100 * 2**20))

    cost = pl.CostEstimate(
        flops=4 * b_pad * D * D + 4 * b_pad * D,
        transcendentals=b_pad,
        bytes_accessed=(b_pad * D * item + 2 * D * D * item
                        + 6 * D * 4 + b_pad * 4),
    )

    row_spec = pl.BlockSpec((1, D), lambda i: (0, 0))
    out = pl.pallas_call(
        dta_kernel,
        out_shape=jax.ShapeDtypeStruct((b_pad, 1), jnp.float32),
        grid=grid,
        in_specs=[
            pl.BlockSpec((tb, D), lambda i: (i, 0)),   # x: batch-tiled, pipelined
            pl.BlockSpec((D, D), lambda i: (0, 0)),    # W1: VMEM-resident
            row_spec,                                  # b1
            row_spec,                                  # gamma
            row_spec,                                  # beta
            pl.BlockSpec((D, D), lambda i: (0, 0)),    # W2: VMEM-resident
            row_spec,                                  # b2
            row_spec,                                  # w3 row
            pl.BlockSpec((1, 1), lambda i: (0, 0)),    # b3
        ],
        out_specs=pl.BlockSpec((tb, 1), lambda i: (i, 0)),
        compiler_params=pltpu.CompilerParams(
            dimension_semantics=("parallel",),
            vmem_limit_bytes=vmem_limit,
        ),
        cost_estimate=cost,
    )(x, w1, b1, gamma, beta, w2, b2, w3, b3)

    return out[:B]


def reference(x, p):
    residual = x @ p["w1"] + p["b1"]
    mean = residual.mean(-1, keepdims=True)
    var = ((residual - mean) ** 2).mean(-1, keepdims=True)
    normed = (residual - mean) / jnp.sqrt(var + 1e-5) * p["gamma"] + p["beta"]
    out = jnp.maximum(normed, 0.0) @ p["w2"] + p["b2"]
    return (residual + out) @ p["w3"] + p["b3"]


def init_params(key, embed_dim):
    ks = jax.random.split(key, 6)
    scale = 1.0 / jnp.sqrt(embed_dim)
    return {
        "w1": jax.random.uniform(ks[0], (embed_dim, embed_dim), jnp.float32, -scale, scale),
        "b1": jax.random.uniform(ks[1], (1, embed_dim), jnp.float32, -scale, scale),
        "gamma": jnp.ones((1, embed_dim), jnp.float32),
        "beta": jnp.zeros((1, embed_dim), jnp.float32),
        "w2": jax.random.uniform(ks[2], (embed_dim, embed_dim), jnp.float32, -scale, scale),
        "b2": jax.random.uniform(ks[3], (1, embed_dim), jnp.float32, -scale, scale),
        "w3": jax.random.uniform(ks[4], (embed_dim, 1), jnp.float32, -scale, scale),
        "b3": jax.random.uniform(ks[5], (1, 1), jnp.float32, -scale, scale),
    }


if __name__ == "__main__":
    key = jax.random.PRNGKey(0)
    kx, kp = jax.random.split(key)

    # Small module-sized case.
    batch, embed_dim = 8, 32
    x = jax.random.normal(kx, (batch, embed_dim), jnp.float32)
    params = init_params(kp, embed_dim)
    y_ref = reference(x, params)

    # Exact f32 path (bit-faithful to the PyTorch module semantics).
    y32 = jax.block_until_ready(dta_predictor(x, params, compute_dtype=jnp.float32))
    assert y32.shape == (batch, 1)
    assert jnp.allclose(y32, y_ref, atol=1e-4, rtol=1e-4), (y32, y_ref)

    # bf16-operand MXU path (f32 accumulation) — looser tolerance as expected.
    ybf = jax.block_until_ready(dta_predictor(x, params, compute_dtype=jnp.bfloat16))
    assert jnp.allclose(ybf, y_ref, atol=1e-1, rtol=1e-1), (ybf, y_ref)

    # Larger case that actually exercises batch tiling (grid of 2 steps).
    batch2, embed2 = 512, 128
    x2 = jax.random.normal(kx, (batch2, embed2), jnp.float32)
    p2 = init_params(kp, embed2)
    y2 = jax.block_until_ready(
        dta_predictor(x2, p2, batch_block=256, compute_dtype=jnp.float32))
    assert y2.shape == (batch2, 1)
    assert jnp.allclose(y2, reference(x2, p2), atol=1e-3, rtol=1e-3)

    print("KERNEL_OK")
</pallas_src>

<mosaic_0001>
module attributes {stable_mosaic.version = 11 : i64} {
  func.func @dta_kernel(%arg0: i32, %arg1: memref<8x32xf32, #tpu.memory_space<vmem>>, %arg2: memref<32x32xf32, #tpu.memory_space<vmem>>, %arg3: memref<1x32xf32, #tpu.memory_space<vmem>>, %arg4: memref<1x32xf32, #tpu.memory_space<vmem>>, %arg5: memref<1x32xf32, #tpu.memory_space<vmem>>, %arg6: memref<32x32xf32, #tpu.memory_space<vmem>>, %arg7: memref<1x32xf32, #tpu.memory_space<vmem>>, %arg8: memref<1x32xf32, #tpu.memory_space<vmem>>, %arg9: memref<1x1xf32, #tpu.memory_space<vmem>>, %arg10: memref<8x1xf32, #tpu.memory_space<vmem>>) attributes {dimension_semantics = [#tpu.dimension_semantics<parallel>], iteration_bounds = array<i64: 1>, scalar_prefetch = 0 : i64, scratch_operands = 0 : i64, tpu.core_type = #tpu.core_type<tc>, window_params = [{transform_indices = @transform_0, window_bounds = array<i64: 8, 32>}, {pipeline_mode = #tpu.pipeline_mode<synchronous>, transform_indices = @transform_1, window_bounds = array<i64: 32, 32>}, {pipeline_mode = #tpu.pipeline_mode<synchronous>, transform_indices = @transform_2, window_bounds = array<i64: 1, 32>}, {pipeline_mode = #tpu.pipeline_mode<synchronous>, transform_indices = @transform_3, window_bounds = array<i64: 1, 32>}, {pipeline_mode = #tpu.pipeline_mode<synchronous>, transform_indices = @transform_4, window_bounds = array<i64: 1, 32>}, {pipeline_mode = #tpu.pipeline_mode<synchronous>, transform_indices = @transform_5, window_bounds = array<i64: 32, 32>}, {pipeline_mode = #tpu.pipeline_mode<synchronous>, transform_indices = @transform_6, window_bounds = array<i64: 1, 32>}, {pipeline_mode = #tpu.pipeline_mode<synchronous>, transform_indices = @transform_7, window_bounds = array<i64: 1, 32>}, {pipeline_mode = #tpu.pipeline_mode<synchronous>, transform_indices = @transform_8, window_bounds = array<i64: 1, 1>}, {transform_indices = @transform_9, window_bounds = array<i64: 8, 1>}]} {
    %c0 = arith.constant 0 : index
    %c0_0 = arith.constant 0 : index
    %0 = vector.load %arg1[%c0, %c0_0] : memref<8x32xf32, #tpu.memory_space<vmem>>, vector<8x32xf32>
    %c0_1 = arith.constant 0 : index
    %c0_2 = arith.constant 0 : index
    %1 = vector.load %arg2[%c0_1, %c0_2] : memref<32x32xf32, #tpu.memory_space<vmem>>, vector<32x32xf32>
    %cst = arith.constant dense<0.000000e+00> : vector<8x32xf32>
    %2 = tpu.matmul %0, %1, %cst {dimension_numbers = #tpu.dot_dimension_numbers<[1], [0], [0], [1], [0, 0, 1, 1], [], []>} : vector<8x32xf32>, vector<32x32xf32>, vector<8x32xf32> -> vector<8x32xf32>
    %c0_3 = arith.constant 0 : index
    %c0_4 = arith.constant 0 : index
    %3 = vector.load %arg3[%c0_3, %c0_4] : memref<1x32xf32, #tpu.memory_space<vmem>>, vector<1x32xf32>
    %4 = vector.broadcast %3 : vector<1x32xf32> to vector<8x32xf32>
    %5 = arith.addf %2, %4 : vector<8x32xf32>
    %cst_5 = arith.constant dense<0.000000e+00> : vector<8xf32>
    %6 = vector.multi_reduction <add>, %5, %cst_5 [1] : vector<8x32xf32> to vector<8xf32>
    %7 = vector.shape_cast %6 : vector<8xf32> to vector<8x1xf32>
    %cst_6 = arith.constant 3.200000e+01 : f32
    %8 = vector.broadcast %cst_6 : f32 to vector<8x1xf32>
    %9 = arith.divf %7, %8 : vector<8x1xf32>
    %10 = vector.broadcast %9 : vector<8x1xf32> to vector<8x32xf32>
    %11 = arith.subf %5, %10 : vector<8x32xf32>
    %12 = arith.mulf %11, %11 : vector<8x32xf32>
    %cst_7 = arith.constant dense<0.000000e+00> : vector<8xf32>
    %13 = vector.multi_reduction <add>, %12, %cst_7 [1] : vector<8x32xf32> to vector<8xf32>
    %14 = vector.shape_cast %13 : vector<8xf32> to vector<8x1xf32>
    %cst_8 = arith.constant 3.200000e+01 : f32
    %15 = vector.broadcast %cst_8 : f32 to vector<8x1xf32>
    %16 = arith.divf %14, %15 : vector<8x1xf32>
    %cst_9 = arith.constant 9.99999974E-6 : f32
    %17 = vector.broadcast %cst_9 : f32 to vector<8x1xf32>
    %18 = arith.addf %16, %17 : vector<8x1xf32>
    %19 = math.rsqrt %18 : vector<8x1xf32>
    %20 = vector.broadcast %19 : vector<8x1xf32> to vector<8x32xf32>
    %21 = arith.mulf %11, %20 : vector<8x32xf32>
    %c0_10 = arith.constant 0 : index
    %c0_11 = arith.constant 0 : index
    %22 = vector.load %arg4[%c0_10, %c0_11] : memref<1x32xf32, #tpu.memory_space<vmem>>, vector<1x32xf32>
    %23 = vector.broadcast %22 : vector<1x32xf32> to vector<8x32xf32>
    %24 = arith.mulf %21, %23 : vector<8x32xf32>
    %c0_12 = arith.constant 0 : index
    %c0_13 = arith.constant 0 : index
    %25 = vector.load %arg5[%c0_12, %c0_13] : memref<1x32xf32, #tpu.memory_space<vmem>>, vector<1x32xf32>
    %26 = vector.broadcast %25 : vector<1x32xf32> to vector<8x32xf32>
    %27 = arith.addf %24, %26 : vector<8x32xf32>
    %cst_14 = arith.constant 0.000000e+00 : f32
    %28 = vector.broadcast %cst_14 : f32 to vector<8x32xf32>
    %29 = arith.maximumf %27, %28 : vector<8x32xf32>
    %c0_15 = arith.constant 0 : index
    %c0_16 = arith.constant 0 : index
    %30 = vector.load %arg6[%c0_15, %c0_16] : memref<32x32xf32, #tpu.memory_space<vmem>>, vector<32x32xf32>
    %cst_17 = arith.constant dense<0.000000e+00> : vector<8x32xf32>
    %31 = tpu.matmul %29, %30, %cst_17 {dimension_numbers = #tpu.dot_dimension_numbers<[1], [0], [0], [1], [0, 0, 1, 1], [], []>} : vector<8x32xf32>, vector<32x32xf32>, vector<8x32xf32> -> vector<8x32xf32>
    %c0_18 = arith.constant 0 : index
    %c0_19 = arith.constant 0 : index
    %32 = vector.load %arg7[%c0_18, %c0_19] : memref<1x32xf32, #tpu.memory_space<vmem>>, vector<1x32xf32>
    %33 = vector.broadcast %32 : vector<1x32xf32> to vector<8x32xf32>
    %34 = arith.addf %31, %33 : vector<8x32xf32>
    %35 = arith.addf %5, %34 : vector<8x32xf32>
    %c0_20 = arith.constant 0 : index
    %c0_21 = arith.constant 0 : index
    %36 = vector.load %arg8[%c0_20, %c0_21] : memref<1x32xf32, #tpu.memory_space<vmem>>, vector<1x32xf32>
    %37 = vector.broadcast %36 : vector<1x32xf32> to vector<8x32xf32>
    %38 = arith.mulf %35, %37 : vector<8x32xf32>
    %cst_22 = arith.constant dense<0.000000e+00> : vector<8xf32>
    %39 = vector.multi_reduction <add>, %38, %cst_22 [1] : vector<8x32xf32> to vector<8xf32>
    %40 = vector.shape_cast %39 : vector<8xf32> to vector<8x1xf32>
    %c0_23 = arith.constant 0 : index
    %c0_24 = arith.constant 0 : index
    %41 = vector.load %arg9[%c0_23, %c0_24] : memref<1x1xf32, #tpu.memory_space<vmem>>, vector<1x1xf32>
    %42 = vector.broadcast %41 : vector<1x1xf32> to vector<8x1xf32>
    %43 = arith.addf %40, %42 : vector<8x1xf32>
    %c0_25 = arith.constant 0 : index
    %c0_26 = arith.constant 0 : index
    %44 = vector.load %arg10[%c0_25, %c0_26] : memref<8x1xf32, #tpu.memory_space<vmem>>, vector<8x1xf32>
    tpu.vector_store %arg10[%c0_25, %c0_26], %43 {strides = array<i32>} : memref<8x1xf32, #tpu.memory_space<vmem>>, vector<8x1xf32>,
    return
  }
  func.func @transform_0(%arg0: i32) -> (i32, i32) {
    %c0_i32 = arith.constant 0 : i32
    %c0_i32_0 = arith.constant 0 : i32
    return %arg0, %c0_i32 : i32, i32
  }
  func.func @transform_1(%arg0: i32) -> (i32, i32) {
    %c0_i32 = arith.constant 0 : i32
    %c0_i32_0 = arith.constant 0 : i32
    %c0_i32_1 = arith.constant 0 : i32
    return %c0_i32, %c0_i32_0 : i32, i32
  }
  func.func @transform_2(%arg0: i32) -> (i32, i32) {
    %c0_i32 = arith.constant 0 : i32
    %c0_i32_0 = arith.constant 0 : i32
    %c0_i32_1 = arith.constant 0 : i32
    return %c0_i32, %c0_i32_0 : i32, i32
  }
  func.func @transform_3(%arg0: i32) -> (i32, i32) {
    %c0_i32 = arith.constant 0 : i32
    %c0_i32_0 = arith.constant 0 : i32
    %c0_i32_1 = arith.constant 0 : i32
    return %c0_i32, %c0_i32_0 : i32, i32
  }
  func.func @transform_4(%arg0: i32) -> (i32, i32) {
    %c0_i32 = arith.constant 0 : i32
    %c0_i32_0 = arith.constant 0 : i32
    %c0_i32_1 = arith.constant 0 : i32
    return %c0_i32, %c0_i32_0 : i32, i32
  }
  func.func @transform_5(%arg0: i32) -> (i32, i32) {
    %c0_i32 = arith.constant 0 : i32
    %c0_i32_0 = arith.constant 0 : i32
    %c0_i32_1 = arith.constant 0 : i32
    return %c0_i32, %c0_i32_0 : i32, i32
  }
  func.func @transform_6(%arg0: i32) -> (i32, i32) {
    %c0_i32 = arith.constant 0 : i32
    %c0_i32_0 = arith.constant 0 : i32
    %c0_i32_1 = arith.constant 0 : i32
    return %c0_i32, %c0_i32_0 : i32, i32
  }
  func.func @transform_7(%arg0: i32) -> (i32, i32) {
    %c0_i32 = arith.constant 0 : i32
    %c0_i32_0 = arith.constant 0 : i32
    %c0_i32_1 = arith.constant 0 : i32
    return %c0_i32, %c0_i32_0 : i32, i32
  }
  func.func @transform_8(%arg0: i32) -> (i32, i32) {
    %c0_i32 = arith.constant 0 : i32
    %c0_i32_0 = arith.constant 0 : i32
    %c0_i32_1 = arith.constant 0 : i32
    return %c0_i32, %c0_i32_0 : i32, i32
  }
  func.func @transform_9(%arg0: i32) -> (i32, i32) {
    %c0_i32 = arith.constant 0 : i32
    %c0_i32_0 = arith.constant 0 : i32
    return %arg0, %c0_i32 : i32, i32
  }
}

</mosaic_0001>

<llo_original>
// kernel: dta_predictor.1
$region0: #{dta_predictor.1}
  #allocation0 [shape = 'u32[]', space=smem, size = 0x4, offset = 0x4, fixed_abs, tag = 'smem constant byte address 0x4 - core index']
  #allocation1 [shape = 'u32[144,128]{1,0:T(1,128)}', space=vmem, size = 0x12000, scoped, tag = 'internal scratch']
  #allocation2 [shape = 'f32[1,1]{1,0:T(1,128)S(1)}', space=vmem, size = 0x200, scoped, tag = 'scoped memory for dta_predictor.1']
  %s0 = inlined_call_operand.hbm [shape: f32[8,32], index: 0, kind: input, shape index: {}]
  %s1 = inlined_call_operand.hbm [shape: f32[32,32], index: 1, kind: input, shape index: {}]
  %s2 = inlined_call_operand.vmem [shape: f32[1,32], index: 2, kind: input, shape index: {}]
  %s3 = inlined_call_operand.vmem [shape: f32[1,32], index: 3, kind: input, shape index: {}]
  %s4 = inlined_call_operand.vmem [shape: f32[1,32], index: 4, kind: input, shape index: {}]
  %s5 = inlined_call_operand.hbm [shape: f32[32,32], index: 5, kind: input, shape index: {}]
  %s6 = inlined_call_operand.vmem [shape: f32[1,32], index: 6, kind: input, shape index: {}]
  %s7 = inlined_call_operand.vmem [shape: f32[1,32], index: 7, kind: input, shape index: {}]
  %s8 = inlined_call_operand.<no memory space> [shape: f32[1,1], index: 8, kind: input, shape index: {}]
  %s9 = inlined_call_operand.vmem [shape: f32[8,1], index: 9, kind: output, shape index: {}]
  %s10 = sld [smem:[#allocation0]]
  $region58: #{dta_predictor.1} parent=0
    _
  %s12 = ssub.s32 1, %s10
  %s13 = scalar_select 0, %s12, %s10
  %v14 = vstv %s8
  %15 = vst [vmem:[#allocation2] sm:$0x1] %v14
  $region1: #{dta_predictor.1} parent=0
    #allocation3 [shape = 'u8[4096]{0}', space=vmem, size = 0x1000, scoped, tag = 'input window, operand 0, single buffered']
    #allocation4 [shape = 's32[1]{0}', space=sflag, size = 0x4, scoped, tag = 'scoped memory for dta_predictor.1']
    #allocation5 [shape = 'u8[16384]{0}', space=vmem, size = 0x4000, scoped, tag = 'input window, operand 1, single buffered']
    #allocation6 [shape = 's32[1]{0}', space=sflag, size = 0x4, scoped, tag = 'scoped memory for dta_predictor.1']
    #allocation7 [shape = 'u8[16384]{0}', space=vmem, size = 0x4000, scoped, tag = 'input window, operand 5, single buffered']
    %16 = vsyncpa [#allocation4], 0
    %17 = vsyncpa [#allocation6], 0
    // Predicated region
    $region2: #{dta_predictor.1} parent=1 // pred_check
      _
    $region3: #{dta_predictor.1} parent=1 // pred_check_branch
      %19 = sbr.rel (0) target = $region5
    $region4: #{dta_predictor.1} parent=1 // pred_region
      %s21 = ssub.s32 128, 128
      %22 = vsyncadd [#allocation4], %s21
      %s24 = sshll.u32 [#allocation3], 4
      %s25 = int_to_ptr.vmem [resolvable:$true] %s24
      %27 = dma.hbm_to_vmem [thread:$0]  %s0, 128, %s25, [#allocation4]
    $region5: #{dta_predictor.1} parent=1 // pred_fallthru
      _
    // Predicated region
    $region6: #{dta_predictor.1} parent=1 // pred_check
      _
    $region7: #{dta_predictor.1} parent=1 // pred_check_branch
      %29 = sbr.rel (0) target = $region9
    $region8: #{dta_predictor.1} parent=1 // pred_region
      %s31 = ssub.s32 512, 512
      %32 = vsyncadd [#allocation6], %s31
      %s33 = sshll.u32 [#allocation5], 4
      %s34 = int_to_ptr.vmem [resolvable:$true] %s33
      %39 = dma.hbm_to_vmem [thread:$0]  %s1, 512, %s34, [#allocation6], 128, 128, 8
    $region9: #{dta_predictor.1} parent=1 // pred_fallthru
      _
    // Predicated region
    $region10: #{dta_predictor.1} parent=1 // pred_check
      _
    $region11: #{dta_predictor.1} parent=1 // pred_check_branch
      %41 = sbr.rel (0) target = $region13
    $region12: #{dta_predictor.1} parent=1 // pred_region
      _
    $region13: #{dta_predictor.1} parent=1 // pred_fallthru
      _
    // Predicated region
    $region14: #{dta_predictor.1} parent=1 // pred_check
      _
    $region15: #{dta_predictor.1} parent=1 // pred_check_branch
      %43 = sbr.rel (0) target = $region17
    $region16: #{dta_predictor.1} parent=1 // pred_region
      _
    $region17: #{dta_predictor.1} parent=1 // pred_fallthru
      _
    // Predicated region
    $region18: #{dta_predictor.1} parent=1 // pred_check
      _
    $region19: #{dta_predictor.1} parent=1 // pred_check_branch
      %45 = sbr.rel (0) target = $region21
    $region20: #{dta_predictor.1} parent=1 // pred_region
      _
    $region21: #{dta_predictor.1} parent=1 // pred_fallthru
      _
    // Predicated region
    $region22: #{dta_predictor.1} parent=1 // pred_check
      _
    $region23: #{dta_predictor.1} parent=1 // pred_check_branch
      %47 = sbr.rel (0) target = $region25
    $region24: #{dta_predictor.1} parent=1 // pred_region
      %s49 = ssub.s32 512, 512
      %50 = vsyncadd [#allocation6], %s49
      %s51 = sshll.u32 [#allocation7], 4
      %s52 = int_to_ptr.vmem [resolvable:$true] %s51
      %57 = dma.hbm_to_vmem [thread:$0]  %s5, 512, %s52, [#allocation6], 128, 128, 8
    $region25: #{dta_predictor.1} parent=1 // pred_fallthru
      _
    // Predicated region
    $region26: #{dta_predictor.1} parent=1 // pred_check
      _
    $region27: #{dta_predictor.1} parent=1 // pred_check_branch
      %59 = sbr.rel (0) target = $region29
    $region28: #{dta_predictor.1} parent=1 // pred_region
      _
    $region29: #{dta_predictor.1} parent=1 // pred_fallthru
      _
    // Predicated region
    $region30: #{dta_predictor.1} parent=1 // pred_check
      _
    $region31: #{dta_predictor.1} parent=1 // pred_check_branch
      %61 = sbr.rel (0) target = $region33
    $region32: #{dta_predictor.1} parent=1 // pred_region
      _
    $region33: #{dta_predictor.1} parent=1 // pred_fallthru
      _
    // Predicated region
    $region34: #{dta_predictor.1} parent=1 // pred_check
      _
    $region35: #{dta_predictor.1} parent=1 // pred_check_branch
      %63 = sbr.rel (0) target = $region37
    $region36: #{dta_predictor.1} parent=1 // pred_region
      _
    $region37: #{dta_predictor.1} parent=1 // pred_fallthru
      _
    // Predicated region
    $region38: #{dta_predictor.1} parent=1 // pred_check
      _
    $region39: #{dta_predictor.1} parent=1 // pred_check_branch
      %65 = sbr.rel (0) target = $region41
    $region40: #{dta_predictor.1} parent=1 // pred_region
      %66 = dma.done [#allocation4], 128
    $region41: #{dta_predictor.1} parent=1 // pred_fallthru
      _
    // Predicated region
    $region42: #{dta_predictor.1} parent=1 // pred_check
      _
    $region43: #{dta_predictor.1} parent=1 // pred_check_branch
      %68 = sbr.rel (0) target = $region45
    $region44: #{dta_predictor.1} parent=1 // pred_region
      %69 = dma.done [#allocation6], 512
    $region45: #{dta_predictor.1} parent=1 // pred_fallthru
      _
    // Predicated region
    $region46: #{dta_predictor.1} parent=1 // pred_check
      _
    $region47: #{dta_predictor.1} parent=1 // pred_check_branch
      %71 = sbr.rel (0) target = $region49
    $region48: #{dta_predictor.1} parent=1 // pred_region
      %72 = dma.done [#allocation6], 512
    $region49: #{dta_predictor.1} parent=1 // pred_fallthru
      _
    %v73 = vld [vmem:[#allocation3] sm:$0xff]
    %v74 = vld [vmem:[#allocation5] sm:$0xff]
    %v75 = vld [vmem:[#allocation5 + $0x8] sm:$0xff]
    %v76 = vld [vmem:[#allocation5 + $0x10] sm:$0xff]
    %v77 = vld [vmem:[#allocation5 + $0x18] sm:$0xff]
    %v78 = vld [vmem:[%s2] sm:$0x1]
    %v80 = vlaneseq
    %v81 = vshrl.u32 %v80, 7
    %v82 = vsub.s32 0, %v81
    %v83 = vrot.slane %v78, %v82
    %vm85 = vcmask 261120
    %v87 = vsel %vm85, %v73, 0
    %89 = vmatprep.subr.mxu0 0.0
    %90 = vmatpush1.msra.mxu0 %v74
    %91 = vmatprep.subr.mxu0 0.0
    %92 = vmatpush1.msra.mxu0 %v75
    %93 = vmatprep.subr.mxu0 0.0
    %94 = vmatpush1.msra.mxu0 %v76
    %95 = vmatprep.subr.mxu0 0.0
    %96 = vmatpush1.msra.mxu0 %v77
    %97 = vmatprep.subr.mxu0 0.0
    %98 = vmatpush1.msra.mxu0 0.0
    %99 = vmatprep.subr.mxu0 0.0
    %100 = vmatpush1.msra.mxu0 0.0
    %101 = vmatprep.subr.mxu0 0.0
    %102 = vmatpush1.msra.mxu0 0.0
    %103 = vmatprep.subr.mxu0 0.0
    %104 = vmatpush1.msra.mxu0 0.0
    %105 = vmatprep.subr.mxu0 0.0
    %106 = vmatpush1.msra.mxu0 0.0
    %107 = vmatprep.subr.mxu0 0.0
    %108 = vmatpush1.msra.mxu0 0.0
    %109 = vmatprep.subr.mxu0 0.0
    %110 = vmatpush1.msra.mxu0 0.0
    %111 = vmatprep.subr.mxu0 0.0
    %112 = vmatpush1.msra.mxu0 0.0
    %113 = vmatprep.subr.mxu0 0.0
    %114 = vmatpush1.msra.mxu0 0.0
    %115 = vmatprep.subr.mxu0 0.0
    %116 = vmatpush1.msra.mxu0 0.0
    %117 = vmatprep.subr.mxu0 0.0
    %118 = vmatpush1.msra.mxu0 0.0
    %119 = vmatprep.subr.mxu0 0.0
    %120 = vmatpush1.msra.mxu0 0.0
    %121 = vmatprep.subr.mxu0 0.0
    %122 = vmatpush1.msra.mxu0 0.0
    %123 = vmatprep.subr.mxu0 0.0
    %124 = vmatpush1.msra.mxu0 0.0
    %125 = vmatprep.subr.mxu0 0.0
    %126 = vmatpush1.msra.mxu0 0.0
    %127 = vmatprep.subr.mxu0 0.0
    %128 = vmatpush1.msra.mxu0 0.0
    %129 = vmatprep.subr.mxu0 0.0
    %130 = vmatpush1.msra.mxu0 0.0
    %131 = vmatprep.subr.mxu0 0.0
    %132 = vmatpush1.msra.mxu0 0.0
    %133 = vmatprep.subr.mxu0 0.0
    %134 = vmatpush1.msra.mxu0 0.0
    %135 = vmatprep.subr.mxu0 0.0
    %136 = vmatpush1.msra.mxu0 0.0
    %137 = vmatprep.subr.mxu0 0.0
    %138 = vmatpush1.msra.mxu0 0.0
    %139 = vmatprep.subr.mxu0 0.0
    %140 = vmatpush1.msra.mxu0 0.0
    %141 = vmatprep.subr.mxu0 0.0
    %142 = vmatpush1.msra.mxu0 0.0
    %143 = vmatprep.subr.mxu0 0.0
    %144 = vmatpush1.msra.mxu0 0.0
    %145 = vmatprep.subr.mxu0 0.0
    %146 = vmatpush1.msra.mxu0 0.0
    %147 = vmatprep.subr.mxu0 0.0
    %148 = vmatpush1.msra.mxu0 0.0
    %149 = vmatprep.subr.mxu0 0.0
    %150 = vmatpush1.msra.mxu0 0.0
    %151 = vmatprep.subr.mxu0 0.0
    %152 = vmatpush1.msra.mxu0 0.0
    %153 = vmatprep.mubr.f32.mxu0 0.0
    %154 = vmatmul.mubr.f32.gmra.mrb[0].mxu0 %v87
    %v155 = vpop.f32.mrb[0].mxu0
    %v156 = vadd.f32 %v83, %v155
    %v157 = vpop.f32.mrb[0].mxu0
    %158 = vdwg.mxu0
    %v159 = vsel %vm85, %v156, 0.0
    %160 = vadd.xlane.f32.xlu0 %v159
    %v161 = vpop.xlane.xlu0 %160
    %v162 = vrcp.pop 32.0
    %v163 = vmul.f32 %v161, %v162
    %v164 = vsub.f32 %v156, %v163
    %v165 = vmul.f32 %v164, %v164
    %v166 = vsel %vm85, %v165, 0.0
    %167 = vadd.xlane.f32.xlu0 %v166
    %v168 = vpop.xlane.xlu0 %167
    %v169 = vmul.f32 %v168, %v162
    %v170 = vadd.f32 %v169, 1e-05
    %v171 = vrsqrt.pop %v170
    %v172 = vmul.f32 %v164, %v171
    %v173 = vld [vmem:[%s3] sm:$0x1]
    %v175 = vlaneseq
    %v176 = vshrl.u32 %v175, 7
    %v177 = vsub.s32 0, %v176
    %v178 = vrot.slane %v173, %v177
    %v180 = vmul.f32 %v172, %v178
    %v181 = vld [vmem:[%s4] sm:$0x1]
    %v183 = vlaneseq
    %v184 = vshrl.u32 %v183, 7
    %v185 = vsub.s32 0, %v184
    %v186 = vrot.slane %v181, %v185
    %v188 = vadd.f32 %v180, %v186
    %v189 = vmax.f32 %v188, 0.0
    %v190 = vld [vmem:[#allocation7] sm:$0xff]
    %v191 = vld [vmem:[#allocation7 + $0x8] sm:$0xff]
    %v192 = vld [vmem:[#allocation7 + $0x10] sm:$0xff]
    %v193 = vld [vmem:[#allocation7 + $0x18] sm:$0xff]
    %v194 = vld [vmem:[%s6] sm:$0x1]
    %v196 = vlaneseq
    %v197 = vshrl.u32 %v196, 7
    %v198 = vsub.s32 0, %v197
    %v199 = vrot.slane %v194, %v198
    %v202 = vsel %vm85, %v189, 0
    %204 = vmatprep.subr.mxu0 0.0
    %205 = vmatpush1.msra.mxu0 %v190
    %206 = vmatprep.subr.mxu0 0.0
    %207 = vmatpush1.msra.mxu0 %v191
    %208 = vmatprep.subr.mxu0 0.0
    %209 = vmatpush1.msra.mxu0 %v192
    %210 = vmatprep.subr.mxu0 0.0
    %211 = vmatpush1.msra.mxu0 %v193
    %212 = vmatprep.subr.mxu0 0.0
    %213 = vmatpush1.msra.mxu0 0.0
    %214 = vmatprep.subr.mxu0 0.0
    %215 = vmatpush1.msra.mxu0 0.0
    %216 = vmatprep.subr.mxu0 0.0
    %217 = vmatpush1.msra.mxu0 0.0
    %218 = vmatprep.subr.mxu0 0.0
    %219 = vmatpush1.msra.mxu0 0.0
    %220 = vmatprep.subr.mxu0 0.0
    %221 = vmatpush1.msra.mxu0 0.0
    %222 = vmatprep.subr.mxu0 0.0
    %223 = vmatpush1.msra.mxu0 0.0
    %224 = vmatprep.subr.mxu0 0.0
    %225 = vmatpush1.msra.mxu0 0.0
    %226 = vmatprep.subr.mxu0 0.0
    %227 = vmatpush1.msra.mxu0 0.0
    %228 = vmatprep.subr.mxu0 0.0
    %229 = vmatpush1.msra.mxu0 0.0
    %230 = vmatprep.subr.mxu0 0.0
    %231 = vmatpush1.msra.mxu0 0.0
    %232 = vmatprep.subr.mxu0 0.0
    %233 = vmatpush1.msra.mxu0 0.0
    %234 = vmatprep.subr.mxu0 0.0
    %235 = vmatpush1.msra.mxu0 0.0
    %236 = vmatprep.subr.mxu0 0.0
    %237 = vmatpush1.msra.mxu0 0.0
    %238 = vmatprep.subr.mxu0 0.0
    %239 = vmatpush1.msra.mxu0 0.0
    %240 = vmatprep.subr.mxu0 0.0
    %241 = vmatpush1.msra.mxu0 0.0
    %242 = vmatprep.subr.mxu0 0.0
    %243 = vmatpush1.msra.mxu0 0.0
    %244 = vmatprep.subr.mxu0 0.0
    %245 = vmatpush1.msra.mxu0 0.0
    %246 = vmatprep.subr.mxu0 0.0
    %247 = vmatpush1.msra.mxu0 0.0
    %248 = vmatprep.subr.mxu0 0.0
    %249 = vmatpush1.msra.mxu0 0.0
    %250 = vmatprep.subr.mxu0 0.0
    %251 = vmatpush1.msra.mxu0 0.0
    %252 = vmatprep.subr.mxu0 0.0
    %253 = vmatpush1.msra.mxu0 0.0
    %254 = vmatprep.subr.mxu0 0.0
    %255 = vmatpush1.msra.mxu0 0.0
    %256 = vmatprep.subr.mxu0 0.0
    %257 = vmatpush1.msra.mxu0 0.0
    %258 = vmatprep.subr.mxu0 0.0
    %259 = vmatpush1.msra.mxu0 0.0
    %260 = vmatprep.subr.mxu0 0.0
    %261 = vmatpush1.msra.mxu0 0.0
    %262 = vmatprep.subr.mxu0 0.0
    %263 = vmatpush1.msra.mxu0 0.0
    %264 = vmatprep.subr.mxu0 0.0
    %265 = vmatpush1.msra.mxu0 0.0
    %266 = vmatprep.subr.mxu0 0.0
    %267 = vmatpush1.msra.mxu0 0.0
    %268 = vmatprep.mubr.f32.mxu0 0.0
    %269 = vmatmul.mubr.f32.gmra.mrb[0].mxu0 %v202
    %v270 = vpop.f32.mrb[0].mxu0
    %v271 = vadd.f32 %v199, %v270
    %v272 = vpop.f32.mrb[0].mxu0
    %273 = vdwg.mxu0
    %v274 = vadd.f32 %v156, %v271
    %v275 = vld [vmem:[%s7] sm:$0x1]
    %v277 = vlaneseq
    %v278 = vshrl.u32 %v277, 7
    %v279 = vsub.s32 0, %v278
    %v280 = vrot.slane %v275, %v279
    %v282 = vmul.f32 %v274, %v280
    %v283 = vsel %vm85, %v282, 0.0
    %284 = vadd.xlane.f32.xlu0 %v283
    %v285 = vpop.xlane.xlu0 %284
    %v286 = vld [vmem:[#allocation2] sm:$0x1]
    %v288 = vlaneseq
    %v289 = vshrl.u32 %v288, 7
    %v290 = vsub.s32 0, %v289
    %v291 = vrot.slane %v286, %v290
    %v293 = vadd.f32 %v285, %v291
    %vm294 = vcmask 7168
    %295 = vst.msk [vmem:[%s9] sm:$0xff] %vm294, %v293
    // Predicated region
    $region50: #{dta_predictor.1} parent=1 // pred_check
      _
    $region51: #{dta_predictor.1} parent=1 // pred_check_branch
      %297 = sbr.rel (0) target = $region53
    $region52: #{dta_predictor.1} parent=1 // pred_region
      _
    $region53: #{dta_predictor.1} parent=1 // pred_fallthru
      _
    // Predicated region
    $region54: #{dta_predictor.1} parent=1 // pred_check
      _
    $region55: #{dta_predictor.1} parent=1 // pred_check_branch
      %299 = sbr.rel (0) target = $region57
    $region56: #{dta_predictor.1} parent=1 // pred_region
      _
    $region57: #{dta_predictor.1} parent=1 // pred_fallthru
      _
    %300 = vsyncpa [#allocation4], 1
    %301 = vsyncpa [#allocation6], 1

</llo_original>
